<compile_context>
chip_gen: v5e
topology: v5e:2x2
jax: 0.10.0
libtpu: 0.0.40
codegen_flags: <defaults>
</compile_context>

<pallas_src>
import functools

import jax
import jax.numpy as jnp
from jax import lax
from jax.experimental import pallas as pl
from jax.experimental.pallas import tpu as pltpu

HIDDEN = 32   # hidden_size (kept small for the synthetic example; module uses 256)
SEQ = 8       # encoder sequence length (max_len)
BATCH = 2

# Per-step encoder block budget (bytes). Double-buffered input + chunk temps +
# outputs stay well inside v7x's 32 MiB default-scoped / 64 MiB physical VMEM
# (and far inside v5e/v6e's 128 MiB).
_ENC_BLOCK_BUDGET = 6 * 1024 * 1024
_VMEM_LIMIT = 32 * 1024 * 1024


# ---------------- block / chunk sizing ----------------

def _pick_batch_block(S, B, H, itemsize=4):
    """Batch rows per grid step: a multiple of 8 (full f32 sublane tiles) that
    divides B and keeps the (S, Bb, H) encoder block under the VMEM budget."""
    if B <= 8:
        return B
    per_batch = S * H * itemsize
    cap = max(8, (_ENC_BLOCK_BUDGET // per_batch) // 8 * 8)
    bb = min(cap, B)
    bb -= bb % 8
    while bb >= 8 and B % bb:
        bb -= 8
    if bb >= 8:
        return bb
    # TODO(synk): pad ragged batches to a multiple of 8 instead of whole-batch.
    return B


def _s_chunk(S):
    """Rows of S processed at once inside the kernel; bounds the (C, Bb, H)
    temporaries so the full (S, Bb, H) product is never materialized."""
    for c in (256, 128, 64, 32, 16, 8):
        if S % c == 0:
            return c
    return S  # TODO(synk): mask a tail chunk when S has no small divisor.


# ---------------- in-kernel helpers ----------------

def _softmax_lanes(x):
    """Softmax over the last (lane) axis; EUP exp + EUP approximate reciprocal."""
    m = jnp.max(x, axis=-1, keepdims=True)
    p = jnp.exp(x - m)
    denom = jnp.sum(p, axis=-1, keepdims=True)
    return p * pl.reciprocal(denom, approx=True)


def _write_energies(enc_ref, q, en_ref):
    """en_ref[s, b] = <q[b, :], enc[s, b, :]>, chunked over S (VPU mul + lane reduce)."""
    S, Bb, H = enc_ref.shape
    C = _s_chunk(S)

    def body(i, carry):
        off = pl.multiple_of(i * C, C)
        e_c = enc_ref[pl.ds(off, C)]                                  # (C, Bb, H)
        en_ref[pl.ds(off, C), :] = jnp.sum(q[None, :, :] * e_c, axis=2)
        return carry

    lax.fori_loop(0, S // C, body, 0)


def _finish(enc_ref, en_ref, w_ref, ctx_ref):
    """Softmax of the (S, Bb) energies, lane-dense weight store, fused context."""
    S, Bb, H = enc_ref.shape
    # Tiny (S, Bb) -> (Bb, S) transpose (XLU) so softmax / exp / the final store
    # all run lane-dense with S on the lane axis.
    p = _softmax_lanes(en_ref[...].T)                                 # (Bb, S)
    w_ref[...] = p
    # Reuse the scratch to hold the probabilities in (S, Bb) orientation so the
    # chunked context reduction slices only along the leading axis.
    en_ref[...] = p.T

    C = _s_chunk(S)

    def body(i, acc):
        off = pl.multiple_of(i * C, C)
        e_c = enc_ref[pl.ds(off, C)]                                  # (C, Bb, H)
        p_c = en_ref[pl.ds(off, C), :]                                # (C, Bb)
        return acc + jnp.sum(p_c[:, :, None] * e_c, axis=0)          # (Bb, H)

    ctx_ref[...] = lax.fori_loop(0, S // C, body,
                                 jnp.zeros((Bb, H), jnp.float32))


# ---------------- kernels ----------------
# Per grid step:
#   hidden_ref : (Bb, H)    enc_ref : (S, Bb, H)
#   w_ref      : (Bb, S)    ctx_ref : (Bb, H)    en_ref : (S, Bb) VMEM scratch

def dot_attn_kernel(hidden_ref, enc_ref, w_ref, ctx_ref, en_ref):
    _write_energies(enc_ref, hidden_ref[...], en_ref)
    _finish(enc_ref, en_ref, w_ref, ctx_ref)


def general_attn_kernel(hidden_ref, enc_ref, wlin_ref, b_ref, w_ref, ctx_ref, en_ref):
    h = hidden_ref[...]                                               # (Bb, H)
    # Fold the nn.Linear into hidden: score = <e, h@W> + <h, bias> (W as stored).
    q = jnp.dot(h, wlin_ref[...], preferred_element_type=jnp.float32)  # (Bb, H)
    _write_energies(enc_ref, q, en_ref)
    hb = jnp.sum(h * b_ref[...], axis=1, keepdims=True)               # (Bb, 1)
    # Constant over S (cancels in the softmax); kept for fidelity to the module.
    en_ref[...] = en_ref[...] + hb.T
    _finish(enc_ref, en_ref, w_ref, ctx_ref)


def concat_attn_kernel(hidden_ref, enc_ref, wh_t_ref, we_t_ref, b_ref, v_ref,
                       w_ref, ctx_ref, en_ref, *, matmul_dtype=None):
    h = hidden_ref[...]                                               # (Bb, H)
    S, Bb, H = enc_ref.shape
    wh_t = wh_t_ref[...]
    we_t = we_t_ref[...]
    if matmul_dtype is not None:            # bf16 MXU path (v6e/v7x), f32 accum
        h = h.astype(matmul_dtype)
        wh_t = wh_t.astype(matmul_dtype)
        we_t = we_t.astype(matmul_dtype)
    # energy = tanh(h @ W_h^T + e @ W_e^T + b); weights pre-transposed in wrapper
    # so both matmuls are plain (M,K)@(K,N).
    hWh = jnp.dot(h, wh_t, preferred_element_type=jnp.float32)        # (Bb, H)
    C = _s_chunk(S)

    def body(i, carry):
        off = pl.multiple_of(i * C, C)
        e_c = enc_ref[pl.ds(off, C)]                                  # (C, Bb, H)
        e_mm = e_c if matmul_dtype is None else e_c.astype(matmul_dtype)
        eWe = jnp.dot(e_mm.reshape(C * Bb, H), we_t,
                      preferred_element_type=jnp.float32).reshape(C, Bb, H)
        energy = jnp.tanh(hWh[None, :, :] + eWe + b_ref[...])         # f32 VPU/EUP
        en_ref[pl.ds(off, C), :] = jnp.sum(v_ref[...] * energy, axis=2)
        return carry

    lax.fori_loop(0, S // C, body, 0)
    _finish(enc_ref, en_ref, w_ref, ctx_ref)


# ---------------- wrapper ----------------

def attn_forward(method, hidden, encoder_outputs, params, return_context=False,
                 concat_matmul_dtype=None):
    """hidden: (1, B, H) f32; encoder_outputs: (S, B, H) f32 (native layouts).

    Returns attention weights (B, 1, S), matching the PyTorch module.  With
    return_context=True also returns the fused context (B, 1, H)
    (== attn_weights.bmm(encoder_outputs.transpose(0, 1))).  On v6e/v7x pass
    concat_matmul_dtype=jnp.bfloat16 for the MXU-native concat matmuls."""
    S, B, H = encoder_outputs.shape
    h2d = jnp.reshape(hidden, (B, H))        # hidden stays 2D / lane-dense in-kernel
    Bb = _pick_batch_block(S, B, H)
    grid = (B // Bb,)

    hid_spec = pl.BlockSpec((Bb, H), lambda i: (i, 0))
    enc_spec = pl.BlockSpec((S, Bb, H), lambda i: (0, i, 0))
    mat_spec = pl.BlockSpec((H, H), lambda i: (0, 0))
    row_spec = pl.BlockSpec((1, H), lambda i: (0, 0))
    out_specs = (pl.BlockSpec((Bb, S), lambda i: (i, 0)),
                 pl.BlockSpec((Bb, H), lambda i: (i, 0)))
    out_shape = (jax.ShapeDtypeStruct((B, S), jnp.float32),
                 jax.ShapeDtypeStruct((B, H), jnp.float32))
    scratch_shapes = [pltpu.VMEM((S, Bb), jnp.float32)]     # per-block score scratch
    compiler_params = pltpu.CompilerParams(
        dimension_semantics=("parallel",),                  # batch blocks -> megacore
        vmem_limit_bytes=_VMEM_LIMIT)

    if method == "dot":
        kernel = dot_attn_kernel
        in_specs = [hid_spec, enc_spec]
        operands = (h2d, encoder_outputs)
    elif method == "general":
        kernel = general_attn_kernel
        in_specs = [hid_spec, enc_spec, mat_spec, row_spec]
        operands = (h2d, encoder_outputs,
                    params["attn_w"], params["attn_b"].reshape(1, H))
    elif method == "concat":
        kernel = functools.partial(concat_attn_kernel,
                                   matmul_dtype=concat_matmul_dtype)
        # Split + pre-transpose W once (one-time parameter prep).
        wh_t = params["attn_w"][:, :H].T                    # (H, H) hidden half^T
        we_t = params["attn_w"][:, H:].T                    # (H, H) encoder half^T
        in_specs = [hid_spec, enc_spec, mat_spec, mat_spec, row_spec, row_spec]
        operands = (h2d, encoder_outputs, wh_t, we_t,
                    params["attn_b"].reshape(1, H), params["v"].reshape(1, H))
    else:
        raise ValueError(method, "is not an appropriate attention method.")

    weights, ctx = pl.pallas_call(
        kernel,
        grid_spec=pltpu.PrefetchScalarGridSpec(
            num_scalar_prefetch=0,
            grid=grid,
            in_specs=in_specs,
            out_specs=out_specs,
            scratch_shapes=scratch_shapes),
        out_shape=out_shape,
        compiler_params=compiler_params,
    )(*operands)

    attn = weights[:, None, :]                              # (B, 1, S)
    if return_context:
        return attn, ctx[:, None, :]                        # (B, 1, H)
    return attn


# ---------------- pure-JAX reference (mirrors the PyTorch forward) ----------------

def attn_reference(method, hidden, encoder_outputs, params):
    if method == "dot":
        energies = jnp.sum(hidden * encoder_outputs, axis=2)          # (S, B)
    elif method == "general":
        energy = encoder_outputs @ params["attn_w"].T + params["attn_b"]
        energies = jnp.sum(hidden * energy, axis=2)
    elif method == "concat":
        S = encoder_outputs.shape[0]
        h_exp = jnp.broadcast_to(hidden, (S,) + hidden.shape[1:])
        cat = jnp.concatenate([h_exp, encoder_outputs], axis=2)
        energy = jnp.tanh(cat @ params["attn_w"].T + params["attn_b"])
        energies = jnp.sum(params["v"] * energy, axis=2)
    energies = energies.T                                             # (B, S)
    return jax.nn.softmax(energies, axis=1)[:, None, :]               # (B, 1, S)


if __name__ == "__main__":
    key = jax.random.PRNGKey(0)
    k_hid, k_enc, k_wg, k_bg, k_wc, k_bc, k_v = jax.random.split(key, 7)

    hidden = jax.random.normal(k_hid, (1, BATCH, HIDDEN), dtype=jnp.float32)
    encoder_outputs = jax.random.normal(k_enc, (SEQ, BATCH, HIDDEN), dtype=jnp.float32)

    params = {
        "dot": {},
        "general": {
            "attn_w": jax.random.normal(k_wg, (HIDDEN, HIDDEN), jnp.float32) * 0.1,
            "attn_b": jax.random.normal(k_bg, (HIDDEN,), jnp.float32) * 0.1,
        },
        "concat": {
            "attn_w": jax.random.normal(k_wc, (HIDDEN, 2 * HIDDEN), jnp.float32) * 0.1,
            "attn_b": jax.random.normal(k_bc, (HIDDEN,), jnp.float32) * 0.1,
            "v": jax.random.normal(k_v, (HIDDEN,), jnp.float32) * 0.1,
        },
    }

    # Tolerance accounts for the EUP approximate reciprocal in the softmax.
    ATOL = RTOL = 2e-3

    for method in ("dot", "general", "concat"):
        attn, ctx = attn_forward(method, hidden, encoder_outputs, params[method],
                                 return_context=True)
        attn = jax.block_until_ready(attn)
        ctx = jax.block_until_ready(ctx)

        ref = attn_reference(method, hidden, encoder_outputs, params[method])
        ref_ctx = jnp.einsum("bs,sbh->bh", ref[:, 0, :], encoder_outputs)[:, None, :]

        assert attn.shape == (BATCH, 1, SEQ), (method, attn.shape)
        assert ctx.shape == (BATCH, 1, HIDDEN), (method, ctx.shape)
        assert jnp.allclose(attn, ref, atol=ATOL, rtol=RTOL), (method, attn, ref)
        assert jnp.allclose(ctx, ref_ctx, atol=ATOL, rtol=RTOL), (method, ctx, ref_ctx)

    print("KERNEL_OK")
</pallas_src>

<mosaic_0001>
module attributes {stable_mosaic.version = 11 : i64} {
  func.func @dot_attn_kernel(%arg0: i32, %arg1: memref<2x32xf32, #tpu.memory_space<vmem>>, %arg2: memref<8x2x32xf32, #tpu.memory_space<vmem>>, %arg3: memref<2x8xf32, #tpu.memory_space<vmem>>, %arg4: memref<2x32xf32, #tpu.memory_space<vmem>>, %arg5: memref<8x2xf32, #tpu.memory_space<vmem>>) attributes {dimension_semantics = [#tpu.dimension_semantics<parallel>], iteration_bounds = array<i64: 1>, scalar_prefetch = 0 : i64, scratch_operands = 1 : i64, tpu.core_type = #tpu.core_type<tc>, window_params = [{transform_indices = @transform_0, window_bounds = array<i64: 2, 32>}, {transform_indices = @transform_1, window_bounds = array<i64: 8, 2, 32>}, {transform_indices = @transform_2, window_bounds = array<i64: 2, 8>}, {transform_indices = @transform_3, window_bounds = array<i64: 2, 32>}]} {
    %c0 = arith.constant 0 : index
    %c0_0 = arith.constant 0 : index
    %0 = vector.load %arg1[%c0, %c0_0] : memref<2x32xf32, #tpu.memory_space<vmem>>, vector<2x32xf32>
    %c0_i32 = arith.constant 0 : i32
    %c8_i32 = arith.constant 8 : i32
    %1 = arith.muli %c0_i32, %c8_i32 : i32
    %2 = tpu.assume_multiple %1, 8 : i32
    %3 = arith.index_cast %2 : i32 to index
    %c0_1 = arith.constant 0 : index
    %c0_2 = arith.constant 0 : index
    %4 = vector.load %arg2[%3, %c0_1, %c0_2] : memref<8x2x32xf32, #tpu.memory_space<vmem>>, vector<8x2x32xf32>
    %5 = vector.shape_cast %0 : vector<2x32xf32> to vector<1x2x32xf32>
    %6 = vector.broadcast %5 : vector<1x2x32xf32> to vector<8x2x32xf32>
    %7 = arith.mulf %6, %4 : vector<8x2x32xf32>
    %cst = arith.constant dense<0.000000e+00> : vector<8x2xf32>
    %8 = vector.multi_reduction <add>, %7, %cst [2] : vector<8x2x32xf32> to vector<8x2xf32>
    %9 = arith.index_cast %2 : i32 to index
    %c0_3 = arith.constant 0 : index
    %10 = vector.load %arg5[%9, %c0_3] : memref<8x2xf32, #tpu.memory_space<vmem>>, vector<8x2xf32>
    tpu.vector_store %arg5[%9, %c0_3], %8 {strides = array<i32>} : memref<8x2xf32, #tpu.memory_space<vmem>>, vector<8x2xf32>,
    %c1_i32 = arith.constant 1 : i32
    %c0_4 = arith.constant 0 : index
    %c0_5 = arith.constant 0 : index
    %11 = vector.load %arg5[%c0_4, %c0_5] : memref<8x2xf32, #tpu.memory_space<vmem>>, vector<8x2xf32>
    %12 = tpu.transpose %11, [1, 0] : vector<8x2xf32> -> vector<2x8xf32>
    %cst_6 = arith.constant dense<0xFF800000> : vector<2xf32>
    %13 = vector.multi_reduction <maximumf>, %12, %cst_6 [1] : vector<2x8xf32> to vector<2xf32>
    %14 = vector.shape_cast %13 : vector<2xf32> to vector<2x1xf32>
    %15 = vector.broadcast %14 : vector<2x1xf32> to vector<2x8xf32>
    %16 = arith.subf %12, %15 : vector<2x8xf32>
    %17 = math.exp %16 : vector<2x8xf32>
    %cst_7 = arith.constant dense<0.000000e+00> : vector<2xf32>
    %18 = vector.multi_reduction <add>, %17, %cst_7 [1] : vector<2x8xf32> to vector<2xf32>
    %19 = vector.shape_cast %18 : vector<2xf32> to vector<2x1xf32>
    %20 = tpu.reciprocal %19 {approx = true} : vector<2x1xf32> -> vector<2x1xf32>
    %21 = vector.broadcast %20 : vector<2x1xf32> to vector<2x8xf32>
    %22 = arith.mulf %17, %21 : vector<2x8xf32>
    %c0_8 = arith.constant 0 : index
    %c0_9 = arith.constant 0 : index
    %23 = vector.load %arg3[%c0_8, %c0_9] : memref<2x8xf32, #tpu.memory_space<vmem>>, vector<2x8xf32>
    tpu.vector_store %arg3[%c0_8, %c0_9], %22 {strides = array<i32>} : memref<2x8xf32, #tpu.memory_space<vmem>>, vector<2x8xf32>,
    %24 = tpu.transpose %22, [1, 0] : vector<2x8xf32> -> vector<8x2xf32>
    %c0_10 = arith.constant 0 : index
    %c0_11 = arith.constant 0 : index
    %25 = vector.load %arg5[%c0_10, %c0_11] : memref<8x2xf32, #tpu.memory_space<vmem>>, vector<8x2xf32>
    tpu.vector_store %arg5[%c0_10, %c0_11], %24 {strides = array<i32>} : memref<8x2xf32, #tpu.memory_space<vmem>>, vector<8x2xf32>,
    %cst_12 = arith.constant 0.000000e+00 : f32
    %26 = vector.broadcast %cst_12 : f32 to vector<2x32xf32>
    %c0_i32_13 = arith.constant 0 : i32
    %c8_i32_14 = arith.constant 8 : i32
    %27 = arith.muli %c0_i32_13, %c8_i32_14 : i32
    %28 = tpu.assume_multiple %27, 8 : i32
    %29 = arith.index_cast %28 : i32 to index
    %c0_15 = arith.constant 0 : index
    %c0_16 = arith.constant 0 : index
    %30 = vector.load %arg2[%29, %c0_15, %c0_16] : memref<8x2x32xf32, #tpu.memory_space<vmem>>, vector<8x2x32xf32>
    %31 = arith.index_cast %28 : i32 to index
    %c0_17 = arith.constant 0 : index
    %32 = vector.load %arg5[%31, %c0_17] : memref<8x2xf32, #tpu.memory_space<vmem>>, vector<8x2xf32>
    %33 = vector.shape_cast %32 : vector<8x2xf32> to vector<8x2x1xf32>
    %34 = vector.broadcast %33 : vector<8x2x1xf32> to vector<8x2x32xf32>
    %35 = arith.mulf %34, %30 : vector<8x2x32xf32>
    %cst_18 = arith.constant dense<0.000000e+00> : vector<2x32xf32>
    %36 = vector.multi_reduction <add>, %35, %cst_18 [0] : vector<8x2x32xf32> to vector<2x32xf32>
    %37 = arith.addf %26, %36 : vector<2x32xf32>
    %c1_i32_19 = arith.constant 1 : i32
    %c0_20 = arith.constant 0 : index
    %c0_21 = arith.constant 0 : index
    %38 = vector.load %arg4[%c0_20, %c0_21] : memref<2x32xf32, #tpu.memory_space<vmem>>, vector<2x32xf32>
    tpu.vector_store %arg4[%c0_20, %c0_21], %37 {strides = array<i32>} : memref<2x32xf32, #tpu.memory_space<vmem>>, vector<2x32xf32>,
    return
  }
  func.func @transform_0(%arg0: i32) -> (i32, i32) {
    %c0_i32 = arith.constant 0 : i32
    %c0_i32_0 = arith.constant 0 : i32
    return %arg0, %c0_i32 : i32, i32
  }
  func.func @transform_1(%arg0: i32) -> (i32, i32, i32) {
    %c0_i32 = arith.constant 0 : i32
    %c0_i32_0 = arith.constant 0 : i32
    %c0_i32_1 = arith.constant 0 : i32
    return %c0_i32, %arg0, %c0_i32_0 : i32, i32, i32
  }
  func.func @transform_2(%arg0: i32) -> (i32, i32) {
    %c0_i32 = arith.constant 0 : i32
    %c0_i32_0 = arith.constant 0 : i32
    return %arg0, %c0_i32 : i32, i32
  }
  func.func @transform_3(%arg0: i32) -> (i32, i32) {
    %c0_i32 = arith.constant 0 : i32
    %c0_i32_0 = arith.constant 0 : i32
    return %arg0, %c0_i32 : i32, i32
  }
}

</mosaic_0001>

<llo_original>
// kernel: tpu_custom_call.1
$region0: #{tpu_custom_call.1}
  #allocation0 [shape = 'u32[]', space=smem, size = 0x4, offset = 0x4, fixed_abs, tag = 'smem constant byte address 0x4 - core index']
  #allocation1 [shape = 'u32[72,128]{1,0:T(1,128)}', space=vmem, size = 0x9000, scoped, tag = 'internal scratch']
  #allocation2 [shape = 'f32[8,2]{1,0:T(8,128)}', space=vmem, size = 0x1000, scoped, tag = 'scratch operand']
  %s0 = inlined_call_operand.hbm [shape: f32[2,32], index: 0, kind: input, shape index: {}]
  %s1 = inlined_call_operand.hbm [shape: f32[8,2,32], index: 1, kind: input, shape index: {}]
  %s2 = inlined_call_operand.hbm [shape: f32[2,8], index: 2, kind: output, shape index: {0}]
  %s3 = inlined_call_operand.hbm [shape: f32[2,32], index: 3, kind: output, shape index: {1}]
  %4 = xla_tuple %s2, %s3
  %s5 = sld [smem:[#allocation0]]
  $region34: #{tpu_custom_call.1} parent=0
    _
  %s7 = ssub.s32 1, %s5
  %s8 = scalar_select 0, %s7, %s5
  $region1: #{tpu_custom_call.1} parent=0
    #allocation3 [shape = 'u8[1024]{0}', space=vmem, size = 0x400, scoped, tag = 'input window, operand 0, single buffered']
    #allocation4 [shape = 's32[1]{0}', space=sflag, size = 0x4, scoped, tag = 'scoped memory for tpu_custom_call.1']
    #allocation5 [shape = 's32[1]{0}', space=sflag, size = 0x4, scoped, tag = 'scoped memory for tpu_custom_call.1']
    #allocation6 [shape = 'u8[8192]{0}', space=vmem, size = 0x2000, scoped, tag = 'input window, operand 1, single buffered']
    #allocation7 [shape = 's32[1]{0}', space=sflag, size = 0x4, scoped, tag = 'scoped memory for tpu_custom_call.1']
    #allocation8 [shape = 'u8[1024]{0}', space=vmem, size = 0x400, scoped, tag = 'output window, operand 0, single buffered']
    #allocation9 [shape = 'u8[1024]{0}', space=vmem, size = 0x400, scoped, tag = 'output window, operand 1, single buffered']
    #allocation10 [shape = 's32[1]{0}', space=sflag, size = 0x4, scoped, tag = 'scoped memory for tpu_custom_call.1']
    %9 = vsyncpa [#allocation4], 0
    %10 = vsyncpa [#allocation7], 0
    %11 = vsyncpa [#allocation5], 0
    %12 = vsyncpa [#allocation10], 0
    // Predicated region
    $region2: #{tpu_custom_call.1} parent=1 // pred_check
      _
    $region3: #{tpu_custom_call.1} parent=1 // pred_check_branch
      %14 = sbr.rel (0) target = $region5
    $region4: #{tpu_custom_call.1} parent=1 // pred_region
      %16 = vsyncadd [#allocation4], 0
      %s18 = sshll.u32 %s0, 4
      %s19 = int_to_ptr.hbm [resolvable:$true] %s18
      %s20 = sshll.u32 [#allocation3], 4
      %s21 = int_to_ptr.vmem [resolvable:$true] %s20
      %23 = dma.hbm_to_vmem [thread:$0]  %s19, 32, %s21, [#allocation4]
    $region5: #{tpu_custom_call.1} parent=1 // pred_fallthru
      _
    // Predicated region
    $region6: #{tpu_custom_call.1} parent=1 // pred_check
      _
    $region7: #{tpu_custom_call.1} parent=1 // pred_check_branch
      %25 = sbr.rel (0) target = $region9
    $region8: #{tpu_custom_call.1} parent=1 // pred_region
      %27 = vsyncadd [#allocation7], 0
      %s28 = sshll.u32 %s1, 4
      %s29 = int_to_ptr.hbm [resolvable:$true] %s28
      %s30 = sshll.u32 [#allocation6], 4
      %s31 = int_to_ptr.vmem [resolvable:$true] %s30
      %36 = dma.hbm_to_vmem [thread:$0]  %s29, 256, %s31, [#allocation7], 32, 32, 2
    $region9: #{tpu_custom_call.1} parent=1 // pred_fallthru
      _
    // Predicated region
    $region10: #{tpu_custom_call.1} parent=1 // pred_check
      _
    $region11: #{tpu_custom_call.1} parent=1 // pred_check_branch
      %38 = sbr.rel (0) target = $region13
    $region12: #{tpu_custom_call.1} parent=1 // pred_region
      %40 = dma.done [#allocation4], 32
    $region13: #{tpu_custom_call.1} parent=1 // pred_fallthru
      _
    // Predicated region
    $region14: #{tpu_custom_call.1} parent=1 // pred_check
      _
    $region15: #{tpu_custom_call.1} parent=1 // pred_check_branch
      %42 = sbr.rel (0) target = $region17
    $region16: #{tpu_custom_call.1} parent=1 // pred_region
      %44 = dma.done [#allocation7], 256
    $region17: #{tpu_custom_call.1} parent=1 // pred_fallthru
      _
    %v45 = vld [vmem:[#allocation3] sm:$0x3]
    %s46 = smul.u32 0, 2
    %s47 = scalar_lea.vmem [#allocation6], %s46
    %v48 = vld [vmem:[%s47] sm:$0x3]
    %v49 = vld [vmem:[%s47 + $0x2] sm:$0x3]
    %v50 = vld [vmem:[%s47 + $0x4] sm:$0x3]
    %v51 = vld [vmem:[%s47 + $0x6] sm:$0x3]
    %v52 = vld [vmem:[%s47 + $0x8] sm:$0x3]
    %v53 = vld [vmem:[%s47 + $0xa] sm:$0x3]
    %v54 = vld [vmem:[%s47 + $0xc] sm:$0x3]
    %v55 = vld [vmem:[%s47 + $0xe] sm:$0x3]
    %v56 = vmul.f32 %v45, %v48
    %v57 = vmul.f32 %v45, %v49
    %v58 = vmul.f32 %v45, %v50
    %v59 = vmul.f32 %v45, %v51
    %v60 = vmul.f32 %v45, %v52
    %v61 = vmul.f32 %v45, %v53
    %v62 = vmul.f32 %v45, %v54
    %v63 = vmul.f32 %v45, %v55
    %vm64 = vcmask 254976
    %v65 = vsel %vm64, %v56, 0.0
    %66 = vadd.xlane.f32.xlu0 %v65
    %v67 = vpop.xlane.xlu0 %66
    %v68 = vsel %vm64, %v57, 0.0
    %69 = vadd.xlane.f32.xlu0 %v68
    %v70 = vpop.xlane.xlu0 %69
    %v71 = vsel %vm64, %v58, 0.0
    %72 = vadd.xlane.f32.xlu0 %v71
    %v73 = vpop.xlane.xlu0 %72
    %v74 = vsel %vm64, %v59, 0.0
    %75 = vadd.xlane.f32.xlu0 %v74
    %v76 = vpop.xlane.xlu0 %75
    %v77 = vsel %vm64, %v60, 0.0
    %78 = vadd.xlane.f32.xlu0 %v77
    %v79 = vpop.xlane.xlu0 %78
    %v80 = vsel %vm64, %v61, 0.0
    %81 = vadd.xlane.f32.xlu0 %v80
    %v82 = vpop.xlane.xlu0 %81
    %v83 = vsel %vm64, %v62, 0.0
    %84 = vadd.xlane.f32.xlu0 %v83
    %v85 = vpop.xlane.xlu0 %84
    %v86 = vsel %vm64, %v63, 0.0
    %87 = vadd.xlane.f32.xlu0 %v86
    %v88 = vpop.xlane.xlu0 %87
    %v97 = vlaneseq
    %v98 = vand.u32 %v97, 127
    %v99 = vperm.slane %v67, %v98
    %v100 = vperm.slane %v70, %v98
    %v101 = vperm.slane %v73, %v98
    %v102 = vperm.slane %v76, %v98
    %v103 = vperm.slane %v79, %v98
    %v104 = vperm.slane %v82, %v98
    %v105 = vperm.slane %v85, %v98
    %v106 = vperm.slane %v88, %v98
    %vm107 = vcmask 1041409
    %v108 = vsel %vm107, %v100, %v99
    %vm109 = vcmask 1042434
    %v110 = vsel %vm109, %v101, %v108
    %vm111 = vcmask 1043459
    %v112 = vsel %vm111, %v102, %v110
    %vm113 = vcmask 1044484
    %v114 = vsel %vm113, %v103, %v112
    %vm115 = vcmask 1045509
    %v116 = vsel %vm115, %v104, %v114
    %vm117 = vcmask 1046534
    %v118 = vsel %vm117, %v105, %v116
    %vm119 = vcmask 1047559
    %v120 = vsel %vm119, %v106, %v118
    %vm122 = vcmask 15360
    %123 = vst.msk [vmem:[#allocation2] sm:$0xff] %vm122, %v120
    %v124 = vld [vmem:[#allocation2] sm:$0xff]
    %125 = vxpose.xlu0.b32.start [1/16] %v124, 128
    %126 = vxpose.xlu0.b32.cont [2/16] 0.0, 128
    %127 = vxpose.xlu0.b32.cont [3/16] 0.0, 128
    %128 = vxpose.xlu0.b32.cont [4/16] 0.0, 128
    %129 = vxpose.xlu0.b32.cont [5/16] 0.0, 128
    %130 = vxpose.xlu0.b32.cont [6/16] 0.0, 128
    %131 = vxpose.xlu0.b32.cont [7/16] 0.0, 128
    %132 = vxpose.xlu0.b32.cont [8/16] 0.0, 128
    %133 = vxpose.xlu0.b32.cont [9/16] 0.0, 128
    %134 = vxpose.xlu0.b32.cont [10/16] 0.0, 128
    %135 = vxpose.xlu0.b32.cont [11/16] 0.0, 128
    %136 = vxpose.xlu0.b32.cont [12/16] 0.0, 128
    %137 = vxpose.xlu0.b32.cont [13/16] 0.0, 128
    %138 = vxpose.xlu0.b32.cont [14/16] 0.0, 128
    %139 = vxpose.xlu0.b32.cont [15/16] 0.0, 128
    %140 = vxpose.xlu0.b32.end [16/16] 0.0, 128
    %v141 = vpop.trf.xlu0
    %v142 = vpop.trf.xlu0
    %v143 = vpop.trf.xlu0
    %v144 = vpop.trf.xlu0
    %v145 = vpop.trf.xlu0
    %v146 = vpop.trf.xlu0
    %v147 = vpop.trf.xlu0
    %v148 = vpop.trf.xlu0
    %v149 = vpop.trf.xlu0
    %v150 = vpop.trf.xlu0
    %v151 = vpop.trf.xlu0
    %v152 = vpop.trf.xlu0
    %v153 = vpop.trf.xlu0
    %v154 = vpop.trf.xlu0
    %v155 = vpop.trf.xlu0
    %v156 = vpop.trf.xlu0
    %vm157 = vcmask 58368
    %v158 = vsel %vm157, %v141, -inf
    %159 = vmax.xlane.f32.xlu0 %v158
    %v160 = vpop.xlane.xlu0 %159
    %v161 = vsub.f32 %v141, %v160
    %v162 = vmul.f32 %v161, 1.442695
    %v163 = vpow.pop %v162
    %v164 = vsel %vm157, %v163, 0.0
    %165 = vadd.xlane.f32.xlu0 %v164
    %v166 = vpop.xlane.xlu0 %165
    %v167 = vrcp.pop %v166
    %v168 = vmul.f32 %v163, %v167
    %169 = vst.msk [vmem:[#allocation8] sm:$0x3] %vm157, %v168
    %170 = vxpose.xlu0.b32.start [1/16] %v168, 128
    %171 = vxpose.xlu0.b32.cont [2/16] 0.0, 128
    %172 = vxpose.xlu0.b32.cont [3/16] 0.0, 128
    %173 = vxpose.xlu0.b32.cont [4/16] 0.0, 128
    %174 = vxpose.xlu0.b32.cont [5/16] 0.0, 128
    %175 = vxpose.xlu0.b32.cont [6/16] 0.0, 128
    %176 = vxpose.xlu0.b32.cont [7/16] 0.0, 128
    %177 = vxpose.xlu0.b32.cont [8/16] 0.0, 128
    %178 = vxpose.xlu0.b32.cont [9/16] 0.0, 128
    %179 = vxpose.xlu0.b32.cont [10/16] 0.0, 128
    %180 = vxpose.xlu0.b32.cont [11/16] 0.0, 128
    %181 = vxpose.xlu0.b32.cont [12/16] 0.0, 128
    %182 = vxpose.xlu0.b32.cont [13/16] 0.0, 128
    %183 = vxpose.xlu0.b32.cont [14/16] 0.0, 128
    %184 = vxpose.xlu0.b32.cont [15/16] 0.0, 128
    %185 = vxpose.xlu0.b32.end [16/16] 0.0, 128
    %v186 = vpop.trf.xlu0
    %v187 = vpop.trf.xlu0
    %v188 = vpop.trf.xlu0
    %v189 = vpop.trf.xlu0
    %v190 = vpop.trf.xlu0
    %v191 = vpop.trf.xlu0
    %v192 = vpop.trf.xlu0
    %v193 = vpop.trf.xlu0
    %v194 = vpop.trf.xlu0
    %v195 = vpop.trf.xlu0
    %v196 = vpop.trf.xlu0
    %v197 = vpop.trf.xlu0
    %v198 = vpop.trf.xlu0
    %v199 = vpop.trf.xlu0
    %v200 = vpop.trf.xlu0
    %v201 = vpop.trf.xlu0
    %202 = vst.msk [vmem:[#allocation2] sm:$0xff] %vm122, %v186
    %v203 = vld [vmem:[%s47] sm:$0x3]
    %v204 = vld [vmem:[%s47 + $0x2] sm:$0x3]
    %v205 = vld [vmem:[%s47 + $0x4] sm:$0x3]
    %v206 = vld [vmem:[%s47 + $0x6] sm:$0x3]
    %v207 = vld [vmem:[%s47 + $0x8] sm:$0x3]
    %v208 = vld [vmem:[%s47 + $0xa] sm:$0x3]
    %v209 = vld [vmem:[%s47 + $0xc] sm:$0x3]
    %v210 = vld [vmem:[%s47 + $0xe] sm:$0x3]
    %v211 = vld [vmem:[#allocation2] sm:$0xff]
    %v212 = vperm.slane %v211, 0
    %v213 = vlaneseq
    %v214 = vshrl.u32 %v213, 7
    %216 = vset.pattern.permute.xlu0 %v214
    %217 = vperm.xlu0 %216, %v212
    %v218 = vpop.permute.xlu0 %217
    %v219 = vperm.slane %v211, 1
    %v220 = vlaneseq
    %v221 = vshrl.u32 %v220, 7
    %223 = vset.pattern.permute.xlu0 %v221
    %224 = vperm.xlu0 %223, %v219
    %v225 = vpop.permute.xlu0 %224
    %v226 = vperm.slane %v211, 2
    %v227 = vlaneseq
    %v228 = vshrl.u32 %v227, 7
    %230 = vset.pattern.permute.xlu0 %v228
    %231 = vperm.xlu0 %230, %v226
    %v232 = vpop.permute.xlu0 %231
    %v233 = vperm.slane %v211, 3
    %v234 = vlaneseq
    %v235 = vshrl.u32 %v234, 7
    %237 = vset.pattern.permute.xlu0 %v235
    %238 = vperm.xlu0 %237, %v233
    %v239 = vpop.permute.xlu0 %238
    %v240 = vperm.slane %v211, 4
    %v241 = vlaneseq
    %v242 = vshrl.u32 %v241, 7
    %244 = vset.pattern.permute.xlu0 %v242
    %245 = vperm.xlu0 %244, %v240
    %v246 = vpop.permute.xlu0 %245
    %v247 = vperm.slane %v211, 5
    %v248 = vlaneseq
    %v249 = vshrl.u32 %v248, 7
    %251 = vset.pattern.permute.xlu0 %v249
    %252 = vperm.xlu0 %251, %v247
    %v253 = vpop.permute.xlu0 %252
    %v254 = vperm.slane %v211, 6
    %v255 = vlaneseq
    %v256 = vshrl.u32 %v255, 7
    %258 = vset.pattern.permute.xlu0 %v256
    %259 = vperm.xlu0 %258, %v254
    %v260 = vpop.permute.xlu0 %259
    %v261 = vperm.slane %v211, 7
    %v262 = vlaneseq
    %v263 = vshrl.u32 %v262, 7
    %265 = vset.pattern.permute.xlu0 %v263
    %266 = vperm.xlu0 %265, %v261
    %v267 = vpop.permute.xlu0 %266
    %v268 = vmul.f32 %v218, %v203
    %v269 = vmul.f32 %v225, %v204
    %v270 = vmul.f32 %v232, %v205
    %v271 = vmul.f32 %v239, %v206
    %v272 = vmul.f32 %v246, %v207
    %v273 = vmul.f32 %v253, %v208
    %v274 = vmul.f32 %v260, %v209
    %v275 = vmul.f32 %v267, %v210
    %v276 = vsel %vm64, %v268, 0.0
    %v277 = vsel %vm64, %v269, 0.0
    %v278 = vadd.f32 %v276, %v277
    %v279 = vsel %vm64, %v270, 0.0
    %v280 = vadd.f32 %v278, %v279
    %v281 = vsel %vm64, %v271, 0.0
    %v282 = vadd.f32 %v280, %v281
    %v283 = vsel %vm64, %v272, 0.0
    %v284 = vadd.f32 %v282, %v283
    %v285 = vsel %vm64, %v273, 0.0
    %v286 = vadd.f32 %v284, %v285
    %v287 = vsel %vm64, %v274, 0.0
    %v288 = vadd.f32 %v286, %v287
    %v289 = vsel %vm64, %v275, 0.0
    %v290 = vadd.f32 %v288, %v289
    %v291 = vadd.f32 %v290, 0.0
    %292 = vst.msk [vmem:[#allocation9] sm:$0x3] %vm64, %v291
    // Predicated region
    $region18: #{tpu_custom_call.1} parent=1 // pred_check
      _
    $region19: #{tpu_custom_call.1} parent=1 // pred_check_branch
      %294 = sbr.rel (0) target = $region21
    $region20: #{tpu_custom_call.1} parent=1 // pred_region
      %296 = vsyncadd [#allocation5], 0
      %s298 = sshll.u32 [#allocation8], 4
      %s299 = int_to_ptr.vmem [resolvable:$true] %s298
      %s300 = sshll.u32 %s2, 4
      %s301 = int_to_ptr.hbm [resolvable:$true] %s300
      %303 = dma.vmem_to_hbm [thread:$0]  %s299, 32, %s301, [#allocation5]
    $region21: #{tpu_custom_call.1} parent=1 // pred_fallthru
      _
    // Predicated region
    $region22: #{tpu_custom_call.1} parent=1 // pred_check
      _
    $region23: #{tpu_custom_call.1} parent=1 // pred_check_branch
      %305 = sbr.rel (0) target = $region25
    $region24: #{tpu_custom_call.1} parent=1 // pred_region
      %307 = vsyncadd [#allocation10], 0
      %s309 = sshll.u32 [#allocation9], 4
      %s310 = int_to_ptr.vmem [resolvable:$true] %s309
      %s311 = sshll.u32 %s3, 4
      %s312 = int_to_ptr.hbm [resolvable:$true] %s311
      %314 = dma.vmem_to_hbm [thread:$0]  %s310, 32, %s312, [#allocation10]
    $region25: #{tpu_custom_call.1} parent=1 // pred_fallthru
      _
    // Predicated region
    $region26: #{tpu_custom_call.1} parent=1 // pred_check
      _
    $region27: #{tpu_custom_call.1} parent=1 // pred_check_branch
      %316 = sbr.rel (0) target = $region29
    $region28: #{tpu_custom_call.1} parent=1 // pred_region
      %318 = dma.done [#allocation5], 32
    $region29: #{tpu_custom_call.1} parent=1 // pred_fallthru
      _
    // Predicated region
    $region30: #{tpu_custom_call.1} parent=1 // pred_check
      _
    $region31: #{tpu_custom_call.1} parent=1 // pred_check_branch
      %320 = sbr.rel (0) target = $region33
    $region32: #{tpu_custom_call.1} parent=1 // pred_region
      %322 = dma.done [#allocation10], 32
    $region33: #{tpu_custom_call.1} parent=1 // pred_fallthru
      _
    %323 = vsyncpa [#allocation4], 1
    %324 = vsyncpa [#allocation7], 1
    %325 = vsyncpa [#allocation5], 1
    %326 = vsyncpa [#allocation10], 1

</llo_original>
